<compile_context>
chip_gen: v5e
topology: v5e:2x2
jax: 0.10.0
libtpu: 0.0.40
codegen_flags: <defaults>
</compile_context>

<pallas_src>
import jax
import jax.numpy as jnp
from jax.experimental import pallas as pl
from jax.experimental.pallas import tpu as pltpu


# ----------------------------------------------------------------------------
# Fused tail kernel: pool(cap) + pool(orig) + (concat folded) classifier head
# ----------------------------------------------------------------------------
def fused_tail_kernel(img_ref, cap_ref, orig_ref, wattn_ref,
                      w1i_ref, w1c_ref, w1o_ref, b1_ref,
                      w2_ref, b2_ref, o_ref):
    # wattn_ref: [1, H] (attn weight row); softmax math is done in f32
    # (the .astype calls are no-ops for f32 inputs; with bf16 inputs only the
    # small element-wise path is promoted, matmuls keep native operand dtype).
    w_row = wattn_ref[...].astype(jnp.float32)

    def pool(x_ref):
        x = x_ref[...].astype(jnp.float32)                 # [TB, S, H]
        # VPU multiply + lane reduce instead of an N=1 MXU matmul.
        scores = jnp.sum(x * w_row, axis=-1)               # [TB, S]
        m = jnp.max(scores, axis=-1, keepdims=True)
        e = jnp.exp(scores - m)
        inv = pl.reciprocal(jnp.sum(e, axis=-1, keepdims=True), approx=True)
        return jnp.sum((e * inv)[:, :, None] * x, axis=1)  # [TB, H] f32

    cap_pool = pool(cap_ref)
    orig_pool = pool(orig_ref)
    img = img_ref[...]                                      # [TB, vh]

    # concat([img, cap, orig]) @ w1  ==  img@w1[:vh] + cap@w1[vh:vh+th] + orig@w1[vh+th:]
    h = (jnp.dot(img, w1i_ref[...], preferred_element_type=jnp.float32)
         + jnp.dot(cap_pool, w1c_ref[...], preferred_element_type=jnp.float32)
         + jnp.dot(orig_pool, w1o_ref[...], preferred_element_type=jnp.float32)
         + b1_ref[...])
    h = jnp.maximum(h, 0.0)                                 # ReLU
    # TODO(synk): Dropout(0.5) omitted — identity under eval() semantics.
    out = jnp.dot(h, w2_ref[...], preferred_element_type=jnp.float32) + b2_ref[...]
    o_ref[...] = out.astype(o_ref.dtype)                    # [TB, 128] lane-dense


# ----------------------------------------------------------------------------
# Wrapper: layout plumbing (split w1, pad w2/b2 to 128 lanes, batch grid)
# ----------------------------------------------------------------------------
def task1_forward(img_feat, cap_hid, orig_hid, params):
    # img_feat: [B, vh]  (== blip vision last_hidden_state[:, 0, :])
    # cap_hid:  [B, S, th] (== bert(caption tokens).last_hidden_state)
    # orig_hid: [B, S, th] (== bert(text_inputs).last_hidden_state)
    B, vh = img_feat.shape
    _, S, th = cap_hid.shape
    hidden = params["w1"].shape[1]
    C = params["w2"].shape[1]
    C_PAD = 128                                   # lane-dense output slab

    # attn bias dropped (cancels in softmax); attn weight as a lane-dense row.
    w_attn_row = params["attn_w"].reshape(1, th)

    w1 = params["w1"]
    w1_img = w1[:vh]
    w1_cap = w1[vh:vh + th]
    w1_orig = w1[vh + th:]
    b1 = params["b1"].reshape(1, hidden)

    w2_pad = jnp.zeros((hidden, C_PAD), params["w2"].dtype).at[:, :C].set(params["w2"])
    b2_pad = jnp.zeros((1, C_PAD), params["b2"].dtype).at[:, :C].set(
        params["b2"].reshape(1, C))

    # Batch block: 8-row blocks when possible (sublane aligned), else whole B.
    TB = 8 if B % 8 == 0 else B
    grid = (B // TB,)

    out_pad = pl.pallas_call(
        fused_tail_kernel,
        out_shape=jax.ShapeDtypeStruct((B, C_PAD), img_feat.dtype),
        grid=grid,
        in_specs=[
            pl.BlockSpec((TB, vh), lambda i: (i, 0)),        # img_feat
            pl.BlockSpec((TB, S, th), lambda i: (i, 0, 0)),  # cap_hid
            pl.BlockSpec((TB, S, th), lambda i: (i, 0, 0)),  # orig_hid
            pl.BlockSpec((1, th), lambda i: (0, 0)),         # attn weight row
            pl.BlockSpec((vh, hidden), lambda i: (0, 0)),    # w1[:vh]
            pl.BlockSpec((th, hidden), lambda i: (0, 0)),    # w1[vh:vh+th]
            pl.BlockSpec((th, hidden), lambda i: (0, 0)),    # w1[vh+th:]
            pl.BlockSpec((1, hidden), lambda i: (0, 0)),     # b1
            pl.BlockSpec((hidden, C_PAD), lambda i: (0, 0)), # w2 (padded)
            pl.BlockSpec((1, C_PAD), lambda i: (0, 0)),      # b2 (padded)
        ],
        out_specs=pl.BlockSpec((TB, C_PAD), lambda i: (i, 0)),
        compiler_params=pltpu.CompilerParams(
            dimension_semantics=("parallel",),
            vmem_limit_bytes=32 * 1024 * 1024,
        ),
    )(img_feat, cap_hid, orig_hid, w_attn_row,
      w1_img, w1_cap, w1_orig, b1, w2_pad, b2_pad)

    return out_pad[:, :C]


# ----------------------------------------------------------------------------
# Pure-JAX reference (matches the PyTorch module tail, incl. attn bias)
# ----------------------------------------------------------------------------
def task1_forward_ref(img_feat, cap_hid, orig_hid, p):
    def pool(x):
        s = jnp.einsum("bsh,ho->bso", x, p["attn_w"]) + p["attn_b"][0, 0]
        w = jax.nn.softmax(s, axis=1)
        return jnp.sum(w * x, axis=1)
    comb = jnp.concatenate([img_feat, pool(cap_hid), pool(orig_hid)], axis=1)
    h = jnp.maximum(comb @ p["w1"] + p["b1"], 0.0)
    return h @ p["w2"] + p["b2"]


if __name__ == "__main__":
    # Small synthetic sizes consistent with the module structure.
    B, S = 2, 8          # batch, sequence length
    vh, th = 32, 32      # "vision hidden", "text hidden" (synthetic)
    hidden, num_classes = 512, 2
    total_dim = vh + 2 * th

    key = jax.random.PRNGKey(0)
    ks = jax.random.split(key, 8)

    # Synthetic backbone outputs (stand-ins for BLIP / BERT features).
    img_feat = jax.random.normal(ks[0], (B, vh), jnp.float32)
    cap_hid = jax.random.normal(ks[1], (B, S, th), jnp.float32)
    orig_hid = jax.random.normal(ks[2], (B, S, th), jnp.float32)

    # Deterministic parameters (shapes from __init__).
    params = {
        "attn_w": jax.random.normal(ks[3], (th, 1), jnp.float32) * 0.1,
        "attn_b": jnp.full((1, 1), 0.3, jnp.float32),   # cancels in softmax
        "w1": jax.random.normal(ks[4], (total_dim, hidden), jnp.float32) * 0.05,
        "b1": jax.random.normal(ks[5], (1, hidden), jnp.float32) * 0.01,
        "w2": jax.random.normal(ks[6], (hidden, num_classes), jnp.float32) * 0.05,
        "b2": jax.random.normal(ks[7], (1, num_classes), jnp.float32) * 0.01,
    }

    out = task1_forward(img_feat, cap_hid, orig_hid, params)
    out = jax.block_until_ready(out)

    ref = task1_forward_ref(img_feat, cap_hid, orig_hid, params)
    assert out.shape == (B, num_classes)
    # tolerance accounts for pl.reciprocal(approx=True) in the softmax denom
    assert jnp.allclose(out, ref, atol=1e-3, rtol=1e-3), (out, ref)

    print("KERNEL_OK")
</pallas_src>

<mosaic_0001>
module attributes {stable_mosaic.version = 11 : i64} {
  func.func @fused_tail_kernel(%arg0: i32, %arg1: memref<2x32xf32, #tpu.memory_space<vmem>>, %arg2: memref<2x8x32xf32, #tpu.memory_space<vmem>>, %arg3: memref<2x8x32xf32, #tpu.memory_space<vmem>>, %arg4: memref<1x32xf32, #tpu.memory_space<vmem>>, %arg5: memref<32x512xf32, #tpu.memory_space<vmem>>, %arg6: memref<32x512xf32, #tpu.memory_space<vmem>>, %arg7: memref<32x512xf32, #tpu.memory_space<vmem>>, %arg8: memref<1x512xf32, #tpu.memory_space<vmem>>, %arg9: memref<512x128xf32, #tpu.memory_space<vmem>>, %arg10: memref<1x128xf32, #tpu.memory_space<vmem>>, %arg11: memref<2x128xf32, #tpu.memory_space<vmem>>) attributes {dimension_semantics = [#tpu.dimension_semantics<parallel>], iteration_bounds = array<i64: 1>, scalar_prefetch = 0 : i64, scratch_operands = 0 : i64, tpu.core_type = #tpu.core_type<tc>, window_params = [{transform_indices = @transform_0, window_bounds = array<i64: 2, 32>}, {transform_indices = @transform_1, window_bounds = array<i64: 2, 8, 32>}, {transform_indices = @transform_2, window_bounds = array<i64: 2, 8, 32>}, {pipeline_mode = #tpu.pipeline_mode<synchronous>, transform_indices = @transform_3, window_bounds = array<i64: 1, 32>}, {pipeline_mode = #tpu.pipeline_mode<synchronous>, transform_indices = @transform_4, window_bounds = array<i64: 32, 512>}, {pipeline_mode = #tpu.pipeline_mode<synchronous>, transform_indices = @transform_5, window_bounds = array<i64: 32, 512>}, {pipeline_mode = #tpu.pipeline_mode<synchronous>, transform_indices = @transform_6, window_bounds = array<i64: 32, 512>}, {pipeline_mode = #tpu.pipeline_mode<synchronous>, transform_indices = @transform_7, window_bounds = array<i64: 1, 512>}, {pipeline_mode = #tpu.pipeline_mode<synchronous>, transform_indices = @transform_8, window_bounds = array<i64: 512, 128>}, {pipeline_mode = #tpu.pipeline_mode<synchronous>, transform_indices = @transform_9, window_bounds = array<i64: 1, 128>}, {transform_indices = @transform_10, window_bounds = array<i64: 2, 128>}]} {
    %c0 = arith.constant 0 : index
    %c0_0 = arith.constant 0 : index
    %0 = vector.load %arg4[%c0, %c0_0] : memref<1x32xf32, #tpu.memory_space<vmem>>, vector<1x32xf32>
    %c0_1 = arith.constant 0 : index
    %c0_2 = arith.constant 0 : index
    %c0_3 = arith.constant 0 : index
    %1 = vector.load %arg2[%c0_1, %c0_2, %c0_3] : memref<2x8x32xf32, #tpu.memory_space<vmem>>, vector<2x8x32xf32>
    %2 = vector.shape_cast %0 : vector<1x32xf32> to vector<1x1x32xf32>
    %3 = vector.broadcast %2 : vector<1x1x32xf32> to vector<2x8x32xf32>
    %4 = arith.mulf %1, %3 : vector<2x8x32xf32>
    %cst = arith.constant dense<0.000000e+00> : vector<2x8xf32>
    %5 = vector.multi_reduction <add>, %4, %cst [2] : vector<2x8x32xf32> to vector<2x8xf32>
    %cst_4 = arith.constant dense<0xFF800000> : vector<2xf32>
    %6 = vector.multi_reduction <maximumf>, %5, %cst_4 [1] : vector<2x8xf32> to vector<2xf32>
    %7 = vector.shape_cast %6 : vector<2xf32> to vector<2x1xf32>
    %8 = vector.broadcast %7 : vector<2x1xf32> to vector<2x8xf32>
    %9 = arith.subf %5, %8 : vector<2x8xf32>
    %10 = math.exp %9 : vector<2x8xf32>
    %cst_5 = arith.constant dense<0.000000e+00> : vector<2xf32>
    %11 = vector.multi_reduction <add>, %10, %cst_5 [1] : vector<2x8xf32> to vector<2xf32>
    %12 = vector.shape_cast %11 : vector<2xf32> to vector<2x1xf32>
    %13 = tpu.reciprocal %12 {approx = true} : vector<2x1xf32> -> vector<2x1xf32>
    %14 = vector.broadcast %13 : vector<2x1xf32> to vector<2x8xf32>
    %15 = arith.mulf %10, %14 : vector<2x8xf32>
    %16 = vector.shape_cast %15 : vector<2x8xf32> to vector<2x8x1xf32>
    %17 = vector.broadcast %16 : vector<2x8x1xf32> to vector<2x8x32xf32>
    %18 = arith.mulf %17, %1 : vector<2x8x32xf32>
    %cst_6 = arith.constant dense<0.000000e+00> : vector<2x32xf32>
    %19 = vector.multi_reduction <add>, %18, %cst_6 [1] : vector<2x8x32xf32> to vector<2x32xf32>
    %c0_7 = arith.constant 0 : index
    %c0_8 = arith.constant 0 : index
    %c0_9 = arith.constant 0 : index
    %20 = vector.load %arg3[%c0_7, %c0_8, %c0_9] : memref<2x8x32xf32, #tpu.memory_space<vmem>>, vector<2x8x32xf32>
    %21 = vector.shape_cast %0 : vector<1x32xf32> to vector<1x1x32xf32>
    %22 = vector.broadcast %21 : vector<1x1x32xf32> to vector<2x8x32xf32>
    %23 = arith.mulf %20, %22 : vector<2x8x32xf32>
    %cst_10 = arith.constant dense<0.000000e+00> : vector<2x8xf32>
    %24 = vector.multi_reduction <add>, %23, %cst_10 [2] : vector<2x8x32xf32> to vector<2x8xf32>
    %cst_11 = arith.constant dense<0xFF800000> : vector<2xf32>
    %25 = vector.multi_reduction <maximumf>, %24, %cst_11 [1] : vector<2x8xf32> to vector<2xf32>
    %26 = vector.shape_cast %25 : vector<2xf32> to vector<2x1xf32>
    %27 = vector.broadcast %26 : vector<2x1xf32> to vector<2x8xf32>
    %28 = arith.subf %24, %27 : vector<2x8xf32>
    %29 = math.exp %28 : vector<2x8xf32>
    %cst_12 = arith.constant dense<0.000000e+00> : vector<2xf32>
    %30 = vector.multi_reduction <add>, %29, %cst_12 [1] : vector<2x8xf32> to vector<2xf32>
    %31 = vector.shape_cast %30 : vector<2xf32> to vector<2x1xf32>
    %32 = tpu.reciprocal %31 {approx = true} : vector<2x1xf32> -> vector<2x1xf32>
    %33 = vector.broadcast %32 : vector<2x1xf32> to vector<2x8xf32>
    %34 = arith.mulf %29, %33 : vector<2x8xf32>
    %35 = vector.shape_cast %34 : vector<2x8xf32> to vector<2x8x1xf32>
    %36 = vector.broadcast %35 : vector<2x8x1xf32> to vector<2x8x32xf32>
    %37 = arith.mulf %36, %20 : vector<2x8x32xf32>
    %cst_13 = arith.constant dense<0.000000e+00> : vector<2x32xf32>
    %38 = vector.multi_reduction <add>, %37, %cst_13 [1] : vector<2x8x32xf32> to vector<2x32xf32>
    %c0_14 = arith.constant 0 : index
    %c0_15 = arith.constant 0 : index
    %39 = vector.load %arg1[%c0_14, %c0_15] : memref<2x32xf32, #tpu.memory_space<vmem>>, vector<2x32xf32>
    %c0_16 = arith.constant 0 : index
    %c0_17 = arith.constant 0 : index
    %40 = vector.load %arg5[%c0_16, %c0_17] : memref<32x512xf32, #tpu.memory_space<vmem>>, vector<32x512xf32>
    %cst_18 = arith.constant dense<0.000000e+00> : vector<2x512xf32>
    %41 = tpu.matmul %39, %40, %cst_18 {dimension_numbers = #tpu.dot_dimension_numbers<[1], [0], [0], [1], [0, 0, 1, 1], [], []>} : vector<2x32xf32>, vector<32x512xf32>, vector<2x512xf32> -> vector<2x512xf32>
    %c0_19 = arith.constant 0 : index
    %c0_20 = arith.constant 0 : index
    %42 = vector.load %arg6[%c0_19, %c0_20] : memref<32x512xf32, #tpu.memory_space<vmem>>, vector<32x512xf32>
    %cst_21 = arith.constant dense<0.000000e+00> : vector<2x512xf32>
    %43 = tpu.matmul %19, %42, %cst_21 {dimension_numbers = #tpu.dot_dimension_numbers<[1], [0], [0], [1], [0, 0, 1, 1], [], []>} : vector<2x32xf32>, vector<32x512xf32>, vector<2x512xf32> -> vector<2x512xf32>
    %44 = arith.addf %41, %43 : vector<2x512xf32>
    %c0_22 = arith.constant 0 : index
    %c0_23 = arith.constant 0 : index
    %45 = vector.load %arg7[%c0_22, %c0_23] : memref<32x512xf32, #tpu.memory_space<vmem>>, vector<32x512xf32>
    %cst_24 = arith.constant dense<0.000000e+00> : vector<2x512xf32>
    %46 = tpu.matmul %38, %45, %cst_24 {dimension_numbers = #tpu.dot_dimension_numbers<[1], [0], [0], [1], [0, 0, 1, 1], [], []>} : vector<2x32xf32>, vector<32x512xf32>, vector<2x512xf32> -> vector<2x512xf32>
    %47 = arith.addf %44, %46 : vector<2x512xf32>
    %c0_25 = arith.constant 0 : index
    %c0_26 = arith.constant 0 : index
    %48 = vector.load %arg8[%c0_25, %c0_26] : memref<1x512xf32, #tpu.memory_space<vmem>>, vector<1x512xf32>
    %49 = vector.broadcast %48 : vector<1x512xf32> to vector<2x512xf32>
    %50 = arith.addf %47, %49 : vector<2x512xf32>
    %cst_27 = arith.constant 0.000000e+00 : f32
    %51 = vector.broadcast %cst_27 : f32 to vector<2x512xf32>
    %52 = arith.maximumf %50, %51 : vector<2x512xf32>
    %c0_28 = arith.constant 0 : index
    %c0_29 = arith.constant 0 : index
    %53 = vector.load %arg9[%c0_28, %c0_29] : memref<512x128xf32, #tpu.memory_space<vmem>>, vector<512x128xf32>
    %cst_30 = arith.constant dense<0.000000e+00> : vector<2x128xf32>
    %54 = tpu.matmul %52, %53, %cst_30 {dimension_numbers = #tpu.dot_dimension_numbers<[1], [0], [0], [1], [0, 0, 1, 1], [], []>} : vector<2x512xf32>, vector<512x128xf32>, vector<2x128xf32> -> vector<2x128xf32>
    %c0_31 = arith.constant 0 : index
    %c0_32 = arith.constant 0 : index
    %55 = vector.load %arg10[%c0_31, %c0_32] : memref<1x128xf32, #tpu.memory_space<vmem>>, vector<1x128xf32>
    %56 = vector.broadcast %55 : vector<1x128xf32> to vector<2x128xf32>
    %57 = arith.addf %54, %56 : vector<2x128xf32>
    %c0_33 = arith.constant 0 : index
    %c0_34 = arith.constant 0 : index
    %58 = vector.load %arg11[%c0_33, %c0_34] : memref<2x128xf32, #tpu.memory_space<vmem>>, vector<2x128xf32>
    tpu.vector_store %arg11[%c0_33, %c0_34], %57 {strides = array<i32>} : memref<2x128xf32, #tpu.memory_space<vmem>>, vector<2x128xf32>,
    return
  }
  func.func @transform_0(%arg0: i32) -> (i32, i32) {
    %c0_i32 = arith.constant 0 : i32
    %c0_i32_0 = arith.constant 0 : i32
    return %arg0, %c0_i32 : i32, i32
  }
  func.func @transform_1(%arg0: i32) -> (i32, i32, i32) {
    %c0_i32 = arith.constant 0 : i32
    %c0_i32_0 = arith.constant 0 : i32
    %c0_i32_1 = arith.constant 0 : i32
    return %arg0, %c0_i32, %c0_i32_0 : i32, i32, i32
  }
  func.func @transform_2(%arg0: i32) -> (i32, i32, i32) {
    %c0_i32 = arith.constant 0 : i32
    %c0_i32_0 = arith.constant 0 : i32
    %c0_i32_1 = arith.constant 0 : i32
    return %arg0, %c0_i32, %c0_i32_0 : i32, i32, i32
  }
  func.func @transform_3(%arg0: i32) -> (i32, i32) {
    %c0_i32 = arith.constant 0 : i32
    %c0_i32_0 = arith.constant 0 : i32
    %c0_i32_1 = arith.constant 0 : i32
    return %c0_i32, %c0_i32_0 : i32, i32
  }
  func.func @transform_4(%arg0: i32) -> (i32, i32) {
    %c0_i32 = arith.constant 0 : i32
    %c0_i32_0 = arith.constant 0 : i32
    %c0_i32_1 = arith.constant 0 : i32
    return %c0_i32, %c0_i32_0 : i32, i32
  }
  func.func @transform_5(%arg0: i32) -> (i32, i32) {
    %c0_i32 = arith.constant 0 : i32
    %c0_i32_0 = arith.constant 0 : i32
    %c0_i32_1 = arith.constant 0 : i32
    return %c0_i32, %c0_i32_0 : i32, i32
  }
  func.func @transform_6(%arg0: i32) -> (i32, i32) {
    %c0_i32 = arith.constant 0 : i32
    %c0_i32_0 = arith.constant 0 : i32
    %c0_i32_1 = arith.constant 0 : i32
    return %c0_i32, %c0_i32_0 : i32, i32
  }
  func.func @transform_7(%arg0: i32) -> (i32, i32) {
    %c0_i32 = arith.constant 0 : i32
    %c0_i32_0 = arith.constant 0 : i32
    %c0_i32_1 = arith.constant 0 : i32
    return %c0_i32, %c0_i32_0 : i32, i32
  }
  func.func @transform_8(%arg0: i32) -> (i32, i32) {
    %c0_i32 = arith.constant 0 : i32
    %c0_i32_0 = arith.constant 0 : i32
    %c0_i32_1 = arith.constant 0 : i32
    return %c0_i32, %c0_i32_0 : i32, i32
  }
  func.func @transform_9(%arg0: i32) -> (i32, i32) {
    %c0_i32 = arith.constant 0 : i32
    %c0_i32_0 = arith.constant 0 : i32
    %c0_i32_1 = arith.constant 0 : i32
    return %c0_i32, %c0_i32_0 : i32, i32
  }
  func.func @transform_10(%arg0: i32) -> (i32, i32) {
    %c0_i32 = arith.constant 0 : i32
    %c0_i32_0 = arith.constant 0 : i32
    return %arg0, %c0_i32 : i32, i32
  }
}

</mosaic_0001>

<llo_original>
// kernel: tpu_custom_call.1
$region0: #{tpu_custom_call.1}
  #allocation0 [shape = 'u32[]', space=smem, size = 0x4, offset = 0x4, fixed_abs, tag = 'smem constant byte address 0x4 - core index']
  #allocation1 [shape = 'u32[72,128]{1,0:T(1,128)}', space=vmem, size = 0x9000, scoped, tag = 'internal scratch']
  %s0 = inlined_call_operand.hbm [shape: f32[2,32], index: 0, kind: input, shape index: {}]
  %s1 = inlined_call_operand.hbm [shape: f32[2,8,32], index: 1, kind: input, shape index: {}]
  %s2 = inlined_call_operand.hbm [shape: f32[2,8,32], index: 2, kind: input, shape index: {}]
  %s3 = inlined_call_operand.vmem [shape: f32[1,32], index: 3, kind: input, shape index: {}]
  %s4 = inlined_call_operand.hbm [shape: f32[32,512], index: 4, kind: input, shape index: {}]
  %s5 = inlined_call_operand.hbm [shape: f32[32,512], index: 5, kind: input, shape index: {}]
  %s6 = inlined_call_operand.hbm [shape: f32[32,512], index: 6, kind: input, shape index: {}]
  %s7 = inlined_call_operand.vmem [shape: f32[1,512], index: 7, kind: input, shape index: {}]
  %s8 = inlined_call_operand.hbm [shape: f32[512,128], index: 8, kind: input, shape index: {}]
  %s9 = inlined_call_operand.vmem [shape: f32[1,128], index: 9, kind: input, shape index: {}]
  %s10 = inlined_call_operand.hbm [shape: f32[2,128], index: 10, kind: output, shape index: {}]
  %s11 = sld [smem:[#allocation0]]
  $region78: #{tpu_custom_call.1} parent=0
    _
  %s13 = ssub.s32 1, %s11
  %s14 = scalar_select 0, %s13, %s11
  $region1: #{tpu_custom_call.1} parent=0
    #allocation2 [shape = 'u8[1024]{0}', space=vmem, size = 0x400, scoped, tag = 'input window, operand 0, single buffered']
    #allocation3 [shape = 's32[1]{0}', space=sflag, size = 0x4, scoped, tag = 'scoped memory for tpu_custom_call.1']
    #allocation4 [shape = 's32[1]{0}', space=sflag, size = 0x4, scoped, tag = 'scoped memory for tpu_custom_call.1']
    #allocation5 [shape = 'u8[8192]{0}', space=vmem, size = 0x2000, scoped, tag = 'input window, operand 1, single buffered']
    #allocation6 [shape = 's32[1]{0}', space=sflag, size = 0x4, scoped, tag = 'scoped memory for tpu_custom_call.1']
    #allocation7 [shape = 'u8[8192]{0}', space=vmem, size = 0x2000, scoped, tag = 'input window, operand 2, single buffered']
    #allocation8 [shape = 'u8[65536]{0}', space=vmem, size = 0x10000, scoped, tag = 'input window, operand 4, single buffered']
    #allocation9 [shape = 's32[1]{0}', space=sflag, size = 0x4, scoped, tag = 'scoped memory for tpu_custom_call.1']
    #allocation10 [shape = 'u8[65536]{0}', space=vmem, size = 0x10000, scoped, tag = 'input window, operand 5, single buffered']
    #allocation11 [shape = 'u8[65536]{0}', space=vmem, size = 0x10000, scoped, tag = 'input window, operand 6, single buffered']
    #allocation12 [shape = 's32[1]{0}', space=sflag, size = 0x4, scoped, tag = 'scoped memory for tpu_custom_call.1']
    #allocation13 [shape = 'u8[262144]{0}', space=vmem, size = 0x40000, scoped, tag = 'input window, operand 8, single buffered']
    #allocation14 [shape = 'u8[1024]{0}', space=vmem, size = 0x400, scoped, tag = 'output window, operand 0, single buffered']
    %15 = vsyncpa [#allocation3], 0
    %16 = vsyncpa [#allocation6], 0
    %17 = vsyncpa [#allocation9], 0
    %18 = vsyncpa [#allocation12], 0
    %19 = vsyncpa [#allocation4], 0
    // Predicated region
    $region2: #{tpu_custom_call.1} parent=1 // pred_check
      _
    $region3: #{tpu_custom_call.1} parent=1 // pred_check_branch
      %21 = sbr.rel (0) target = $region5
    $region4: #{tpu_custom_call.1} parent=1 // pred_region
      %23 = vsyncadd [#allocation3], 0
      %s25 = sshll.u32 %s0, 4
      %s26 = int_to_ptr.hbm [resolvable:$true] %s25
      %s27 = sshll.u32 [#allocation2], 4
      %s28 = int_to_ptr.vmem [resolvable:$true] %s27
      %30 = dma.hbm_to_vmem [thread:$0]  %s26, 32, %s28, [#allocation3]
    $region5: #{tpu_custom_call.1} parent=1 // pred_fallthru
      _
    // Predicated region
    $region6: #{tpu_custom_call.1} parent=1 // pred_check
      _
    $region7: #{tpu_custom_call.1} parent=1 // pred_check_branch
      %32 = sbr.rel (0) target = $region9
    $region8: #{tpu_custom_call.1} parent=1 // pred_region
      %34 = vsyncadd [#allocation6], 0
      %s35 = sshll.u32 %s1, 4
      %s36 = int_to_ptr.hbm [resolvable:$true] %s35
      %s37 = sshll.u32 [#allocation5], 4
      %s38 = int_to_ptr.vmem [resolvable:$true] %s37
      %43 = dma.hbm_to_vmem [thread:$0]  %s36, 256, %s38, [#allocation6], 128, 128, 8
    $region9: #{tpu_custom_call.1} parent=1 // pred_fallthru
      _
    // Predicated region
    $region10: #{tpu_custom_call.1} parent=1 // pred_check
      _
    $region11: #{tpu_custom_call.1} parent=1 // pred_check_branch
      %45 = sbr.rel (0) target = $region13
    $region12: #{tpu_custom_call.1} parent=1 // pred_region
      %47 = vsyncadd [#allocation6], 0
      %s48 = sshll.u32 %s2, 4
      %s49 = int_to_ptr.hbm [resolvable:$true] %s48
      %s50 = sshll.u32 [#allocation7], 4
      %s51 = int_to_ptr.vmem [resolvable:$true] %s50
      %56 = dma.hbm_to_vmem [thread:$0]  %s49, 256, %s51, [#allocation6], 128, 128, 8
    $region13: #{tpu_custom_call.1} parent=1 // pred_fallthru
      _
    // Predicated region
    $region14: #{tpu_custom_call.1} parent=1 // pred_check
      _
    $region15: #{tpu_custom_call.1} parent=1 // pred_check_branch
      %58 = sbr.rel (0) target = $region17
    $region16: #{tpu_custom_call.1} parent=1 // pred_region
      _
    $region17: #{tpu_custom_call.1} parent=1 // pred_fallthru
      _
    // Predicated region
    $region18: #{tpu_custom_call.1} parent=1 // pred_check
      _
    $region19: #{tpu_custom_call.1} parent=1 // pred_check_branch
      %60 = sbr.rel (0) target = $region21
    $region20: #{tpu_custom_call.1} parent=1 // pred_region
      %62 = vsyncadd [#allocation9], 0
      %s63 = sshll.u32 %s4, 4
      %s64 = int_to_ptr.hbm [resolvable:$true] %s63
      %s65 = sshll.u32 [#allocation8], 4
      %s66 = int_to_ptr.vmem [resolvable:$true] %s65
      %71 = dma.hbm_to_vmem [thread:$0]  %s64, 2048, %s66, [#allocation9], 512, 512, 32
    $region21: #{tpu_custom_call.1} parent=1 // pred_fallthru
      _
    // Predicated region
    $region22: #{tpu_custom_call.1} parent=1 // pred_check
      _
    $region23: #{tpu_custom_call.1} parent=1 // pred_check_branch
      %73 = sbr.rel (0) target = $region25
    $region24: #{tpu_custom_call.1} parent=1 // pred_region
      %75 = vsyncadd [#allocation9], 0
      %s76 = sshll.u32 %s5, 4
      %s77 = int_to_ptr.hbm [resolvable:$true] %s76
      %s78 = sshll.u32 [#allocation10], 4
      %s79 = int_to_ptr.vmem [resolvable:$true] %s78
      %84 = dma.hbm_to_vmem [thread:$0]  %s77, 2048, %s79, [#allocation9], 512, 512, 32
    $region25: #{tpu_custom_call.1} parent=1 // pred_fallthru
      _
    // Predicated region
    $region26: #{tpu_custom_call.1} parent=1 // pred_check
      _
    $region27: #{tpu_custom_call.1} parent=1 // pred_check_branch
      %86 = sbr.rel (0) target = $region29
    $region28: #{tpu_custom_call.1} parent=1 // pred_region
      %88 = vsyncadd [#allocation12], 0
      %s89 = sshll.u32 %s6, 4
      %s90 = int_to_ptr.hbm [resolvable:$true] %s89
      %s91 = sshll.u32 [#allocation11], 4
      %s92 = int_to_ptr.vmem [resolvable:$true] %s91
      %97 = dma.hbm_to_vmem [thread:$0]  %s90, 2048, %s92, [#allocation12], 512, 512, 32
    $region29: #{tpu_custom_call.1} parent=1 // pred_fallthru
      _
    // Predicated region
    $region30: #{tpu_custom_call.1} parent=1 // pred_check
      _
    $region31: #{tpu_custom_call.1} parent=1 // pred_check_branch
      %99 = sbr.rel (0) target = $region33
    $region32: #{tpu_custom_call.1} parent=1 // pred_region
      _
    $region33: #{tpu_custom_call.1} parent=1 // pred_fallthru
      _
    // Predicated region
    $region34: #{tpu_custom_call.1} parent=1 // pred_check
      _
    $region35: #{tpu_custom_call.1} parent=1 // pred_check_branch
      %101 = sbr.rel (0) target = $region37
    $region36: #{tpu_custom_call.1} parent=1 // pred_region
      %103 = vsyncadd [#allocation12], 0
      %s104 = sshll.u32 %s8, 4
      %s105 = int_to_ptr.hbm [resolvable:$true] %s104
      %s106 = sshll.u32 [#allocation13], 4
      %s107 = int_to_ptr.vmem [resolvable:$true] %s106
      %112 = dma.hbm_to_vmem [thread:$0]  %s105, 8192, %s107, [#allocation12], 128, 128, 8
    $region37: #{tpu_custom_call.1} parent=1 // pred_fallthru
      _
    // Predicated region
    $region38: #{tpu_custom_call.1} parent=1 // pred_check
      _
    $region39: #{tpu_custom_call.1} parent=1 // pred_check_branch
      %114 = sbr.rel (0) target = $region41
    $region40: #{tpu_custom_call.1} parent=1 // pred_region
      _
    $region41: #{tpu_custom_call.1} parent=1 // pred_fallthru
      _
    // Predicated region
    $region42: #{tpu_custom_call.1} parent=1 // pred_check
      _
    $region43: #{tpu_custom_call.1} parent=1 // pred_check_branch
      %116 = sbr.rel (0) target = $region45
    $region44: #{tpu_custom_call.1} parent=1 // pred_region
      %118 = dma.done [#allocation3], 32
    $region45: #{tpu_custom_call.1} parent=1 // pred_fallthru
      _
    // Predicated region
    $region46: #{tpu_custom_call.1} parent=1 // pred_check
      _
    $region47: #{tpu_custom_call.1} parent=1 // pred_check_branch
      %120 = sbr.rel (0) target = $region49
    $region48: #{tpu_custom_call.1} parent=1 // pred_region
      %122 = dma.done [#allocation6], 256
    $region49: #{tpu_custom_call.1} parent=1 // pred_fallthru
      _
    // Predicated region
    $region50: #{tpu_custom_call.1} parent=1 // pred_check
      _
    $region51: #{tpu_custom_call.1} parent=1 // pred_check_branch
      %124 = sbr.rel (0) target = $region53
    $region52: #{tpu_custom_call.1} parent=1 // pred_region
      %126 = dma.done [#allocation6], 256
    $region53: #{tpu_custom_call.1} parent=1 // pred_fallthru
      _
    // Predicated region
    $region54: #{tpu_custom_call.1} parent=1 // pred_check
      _
    $region55: #{tpu_custom_call.1} parent=1 // pred_check_branch
      %128 = sbr.rel (0) target = $region57
    $region56: #{tpu_custom_call.1} parent=1 // pred_region
      %130 = dma.done [#allocation9], 2048
    $region57: #{tpu_custom_call.1} parent=1 // pred_fallthru
      _
    // Predicated region
    $region58: #{tpu_custom_call.1} parent=1 // pred_check
      _
    $region59: #{tpu_custom_call.1} parent=1 // pred_check_branch
      %132 = sbr.rel (0) target = $region61
    $region60: #{tpu_custom_call.1} parent=1 // pred_region
      %134 = dma.done [#allocation9], 2048
    $region61: #{tpu_custom_call.1} parent=1 // pred_fallthru
      _
    // Predicated region
    $region62: #{tpu_custom_call.1} parent=1 // pred_check
      _
    $region63: #{tpu_custom_call.1} parent=1 // pred_check_branch
      %136 = sbr.rel (0) target = $region65
    $region64: #{tpu_custom_call.1} parent=1 // pred_region
      %138 = dma.done [#allocation12], 2048
    $region65: #{tpu_custom_call.1} parent=1 // pred_fallthru
      _
    // Predicated region
    $region66: #{tpu_custom_call.1} parent=1 // pred_check
      _
    $region67: #{tpu_custom_call.1} parent=1 // pred_check_branch
      %140 = sbr.rel (0) target = $region69
    $region68: #{tpu_custom_call.1} parent=1 // pred_region
      %142 = dma.done [#allocation12], 8192
    $region69: #{tpu_custom_call.1} parent=1 // pred_fallthru
      _
    %v143 = vld [vmem:[%s3] sm:$0x1]
    %v144 = vld [vmem:[#allocation5] sm:$0xff]
    %v145 = vld [vmem:[#allocation5 + $0x8] sm:$0xff]
    %v147 = vperm.slane %v143, 0
    %v149 = vmul.f32 %v144, %v147
    %v150 = vmul.f32 %v145, %v147
    %vm151 = vcmask 261120
    %v152 = vsel %vm151, %v149, 0.0
    %153 = vadd.xlane.f32.xlu0 %v152
    %v154 = vpop.xlane.xlu0 %153
    %v155 = vsel %vm151, %v150, 0.0
    %156 = vadd.xlane.f32.xlu0 %v155
    %v157 = vpop.xlane.xlu0 %156
    %v160 = vlaneseq
    %v161 = vand.u32 %v160, 127
    %v162 = vperm.slane %v154, %v161
    %v163 = vperm.slane %v157, %v161
    %vm164 = vcmask 1041409
    %v165 = vsel %vm164, %v163, %v162
    %vm167 = vcmask 58368
    %v168 = vsel %vm167, %v165, -inf
    %169 = vmax.xlane.f32.xlu0 %v168
    %v170 = vpop.xlane.xlu0 %169
    %v172 = vperm.slane %v170, 0
    %v173 = vperm.slane %v170, 1
    %v176 = vsub.f32 %v154, %v172
    %v177 = vsub.f32 %v157, %v173
    %v178 = vmul.f32 %v176, 1.442695
    %v179 = vpow.pop %v178
    %v180 = vmul.f32 %v177, 1.442695
    %v181 = vpow.pop %v180
    %184 = vset.pattern.permute.xlu0 0
    %185 = vperm.xlu0 %184, %v179
    %v186 = vpop.permute.xlu0 %185
    %187 = vset.pattern.permute.xlu0 0
    %188 = vperm.xlu0 %187, %v181
    %v189 = vpop.permute.xlu0 %188
    %v190 = vperm.slane %v186, %v161
    %v191 = vperm.slane %v189, %v161
    %v192 = vsel %vm164, %v191, %v190
    %v194 = vsel %vm167, %v192, 0.0
    %195 = vadd.xlane.f32.xlu0 %v194
    %v196 = vpop.xlane.xlu0 %195
    %v197 = vrcp.pop %v196
    %v199 = vperm.slane %v197, 0
    %v200 = vperm.slane %v197, 1
    %v203 = vmul.f32 %v179, %v199
    %v204 = vmul.f32 %v181, %v200
    %206 = vset.pattern.permute.xlu0 0
    %207 = vperm.xlu0 %206, %v203
    %v208 = vpop.permute.xlu0 %207
    %211 = vset.pattern.permute.xlu0 0
    %212 = vperm.xlu0 %211, %v204
    %v213 = vpop.permute.xlu0 %212
    %v215 = vmul.f32 %v208, %v144
    %v216 = vmul.f32 %v213, %v145
    %v217 = vsel %vm151, %v215, 0.0
    %v218 = vrot.slane %v217, 4
    %v219 = vadd.f32 %v217, %v218
    %v220 = vrot.slane %v219, 2
    %v221 = vadd.f32 %v219, %v220
    %v222 = vrot.slane %v221, 1
    %v223 = vadd.f32 %v221, %v222
    %v224 = vsel %vm151, %v216, 0.0
    %v225 = vrot.slane %v224, 4
    %v226 = vadd.f32 %v224, %v225
    %v227 = vrot.slane %v226, 2
    %v228 = vadd.f32 %v226, %v227
    %v229 = vrot.slane %v228, 1
    %v230 = vadd.f32 %v228, %v229
    %v231 = vld [vmem:[#allocation7] sm:$0xff]
    %v232 = vld [vmem:[#allocation7 + $0x8] sm:$0xff]
    %v233 = vmul.f32 %v231, %v147
    %v234 = vmul.f32 %v232, %v147
    %v235 = vsel %vm151, %v233, 0.0
    %236 = vadd.xlane.f32.xlu0 %v235
    %v237 = vpop.xlane.xlu0 %236
    %v238 = vsel %vm151, %v234, 0.0
    %239 = vadd.xlane.f32.xlu0 %v238
    %v240 = vpop.xlane.xlu0 %239
    %v243 = vperm.slane %v237, %v161
    %v244 = vperm.slane %v240, %v161
    %v245 = vsel %vm164, %v244, %v243
    %v247 = vsel %vm167, %v245, -inf
    %248 = vmax.xlane.f32.xlu0 %v247
    %v249 = vpop.xlane.xlu0 %248
    %v251 = vperm.slane %v249, 0
    %v252 = vperm.slane %v249, 1
    %v255 = vsub.f32 %v237, %v251
    %v256 = vsub.f32 %v240, %v252
    %v257 = vmul.f32 %v255, 1.442695
    %v258 = vpow.pop %v257
    %v259 = vmul.f32 %v256, 1.442695
    %v260 = vpow.pop %v259
    %263 = vset.pattern.permute.xlu0 0
    %264 = vperm.xlu0 %263, %v258
    %v265 = vpop.permute.xlu0 %264
    %266 = vset.pattern.permute.xlu0 0
    %267 = vperm.xlu0 %266, %v260
    %v268 = vpop.permute.xlu0 %267
    %v269 = vperm.slane %v265, %v161
    %v270 = vperm.slane %v268, %v161
    %v271 = vsel %vm164, %v270, %v269
    %v273 = vsel %vm167, %v271, 0.0
    %274 = vadd.xlane.f32.xlu0 %v273
    %v275 = vpop.xlane.xlu0 %274
    %v276 = vrcp.pop %v275
    %v278 = vperm.slane %v276, 0
    %v279 = vperm.slane %v276, 1
    %v282 = vmul.f32 %v258, %v278
    %v283 = vmul.f32 %v260, %v279
    %285 = vset.pattern.permute.xlu0 0
    %286 = vperm.xlu0 %285, %v282
    %v287 = vpop.permute.xlu0 %286
    %290 = vset.pattern.permute.xlu0 0
    %291 = vperm.xlu0 %290, %v283
    %v292 = vpop.permute.xlu0 %291
    %v294 = vmul.f32 %v287, %v231
    %v295 = vmul.f32 %v292, %v232
    %v296 = vsel %vm151, %v294, 0.0
    %v297 = vrot.slane %v296, 4
    %v298 = vadd.f32 %v296, %v297
    %v299 = vrot.slane %v298, 2
    %v300 = vadd.f32 %v298, %v299
    %v301 = vrot.slane %v300, 1
    %v302 = vadd.f32 %v300, %v301
    %v303 = vsel %vm151, %v295, 0.0
    %v304 = vrot.slane %v303, 4
    %v305 = vadd.f32 %v303, %v304
    %v306 = vrot.slane %v305, 2
    %v307 = vadd.f32 %v305, %v306
    %v308 = vrot.slane %v307, 1
    %v309 = vadd.f32 %v307, %v308
    %v310 = vld [vmem:[#allocation2] sm:$0x3]
    %v311 = vld [vmem:[#allocation8] sm:$0xff]
    %v312 = vld [vmem:[#allocation8 + $0x8] sm:$0xff]
    %v313 = vld [vmem:[#allocation8 + $0x10] sm:$0xff]
    %v314 = vld [vmem:[#allocation8 + $0x18] sm:$0xff]
    %v315 = vld [vmem:[#allocation8 + $0x20] sm:$0xff]
    %v316 = vld [vmem:[#allocation8 + $0x28] sm:$0xff]
    %v317 = vld [vmem:[#allocation8 + $0x30] sm:$0xff]
    %v318 = vld [vmem:[#allocation8 + $0x38] sm:$0xff]
    %v319 = vld [vmem:[#allocation8 + $0x40] sm:$0xff]
    %v320 = vld [vmem:[#allocation8 + $0x48] sm:$0xff]
    %v321 = vld [vmem:[#allocation8 + $0x50] sm:$0xff]
    %v322 = vld [vmem:[#allocation8 + $0x58] sm:$0xff]
    %v323 = vld [vmem:[#allocation8 + $0x60] sm:$0xff]
    %v324 = vld [vmem:[#allocation8 + $0x68] sm:$0xff]
    %v325 = vld [vmem:[#allocation8 + $0x70] sm:$0xff]
    %v326 = vld [vmem:[#allocation8 + $0x78] sm:$0xff]
    %v327 = vld [vmem:[#allocation10] sm:$0xff]
    %v328 = vld [vmem:[#allocation10 + $0x8] sm:$0xff]
    %v329 = vld [vmem:[#allocation10 + $0x10] sm:$0xff]
    %v330 = vld [vmem:[#allocation10 + $0x18] sm:$0xff]
    %v331 = vld [vmem:[#allocation10 + $0x20] sm:$0xff]
    %v332 = vld [vmem:[#allocation10 + $0x28] sm:$0xff]
    %v333 = vld [vmem:[#allocation10 + $0x30] sm:$0xff]
    %v334 = vld [vmem:[#allocation10 + $0x38] sm:$0xff]
    %v335 = vld [vmem:[#allocation10 + $0x40] sm:$0xff]
    %v336 = vld [vmem:[#allocation10 + $0x48] sm:$0xff]
    %v337 = vld [vmem:[#allocation10 + $0x50] sm:$0xff]
    %v338 = vld [vmem:[#allocation10 + $0x58] sm:$0xff]
    %v339 = vld [vmem:[#allocation10 + $0x60] sm:$0xff]
    %v340 = vld [vmem:[#allocation10 + $0x68] sm:$0xff]
    %v341 = vld [vmem:[#allocation10 + $0x70] sm:$0xff]
    %v342 = vld [vmem:[#allocation10 + $0x78] sm:$0xff]
    %v345 = vsel %vm164, %v230, %v223
    %v346 = vsel %vm151, %v345, 0
    %348 = vmatpush.msra.mxu0 0.0
    %349 = vmatpush.msra.mxu0 0.0
    %350 = vmatpush.msra.mxu0 0.0
    %351 = vmatpush.msra.mxu0 0.0
    %352 = vmatpush.msra.mxu0 0.0
    %353 = vmatpush.msra.mxu0 0.0
    %354 = vmatpush.msra.mxu0 0.0
    %355 = vmatpush.msra.mxu0 0.0
    %356 = vmatpush.msra.mxu0 0.0
    %357 = vmatpush.msra.mxu0 0.0
    %358 = vmatpush.msra.mxu0 0.0
    %359 = vmatpush.msra.mxu0 0.0
    %360 = vmatpush.msra.mxu0 %v339
    %361 = vmatpush.msra.mxu0 %v335
    %362 = vmatpush.msra.mxu0 %v331
    %363 = vmatpush.msra.mxu0 %v327
    %364 = vmatmul.f32.gmra.mxu0 %v346
    %v365 = vpop.f32.mrf.mxu0
    %v366 = vadd.f32 0.0, %v365
    %367 = vdwg.mxu0
    %368 = vmatpush.msra.mxu0 0.0
    %369 = vmatpush.msra.mxu0 0.0
    %370 = vmatpush.msra.mxu0 0.0
    %371 = vmatpush.msra.mxu0 0.0
    %372 = vmatpush.msra.mxu0 0.0
    %373 = vmatpush.msra.mxu0 0.0
    %374 = vmatpush.msra.mxu0 0.0
    %375 = vmatpush.msra.mxu0 0.0
    %376 = vmatpush.msra.mxu0 0.0
    %377 = vmatpush.msra.mxu0 0.0
    %378 = vmatpush.msra.mxu0 0.0
    %379 = vmatpush.msra.mxu0 0.0
    %380 = vmatpush.msra.mxu0 %v340
    %381 = vmatpush.msra.mxu0 %v336
    %382 = vmatpush.msra.mxu0 %v332
    %383 = vmatpush.msra.mxu0 %v328
    %384 = vmatmul.f32.gmra.mxu0 %v346
    %v385 = vpop.f32.mrf.mxu0
    %v386 = vadd.f32 0.0, %v385
    %387 = vdwg.mxu0
    %388 = vmatpush.msra.mxu0 0.0
    %389 = vmatpush.msra.mxu0 0.0
    %390 = vmatpush.msra.mxu0 0.0
    %391 = vmatpush.msra.mxu0 0.0
    %392 = vmatpush.msra.mxu0 0.0
    %393 = vmatpush.msra.mxu0 0.0
    %394 = vmatpush.msra.mxu0 0.0
    %395 = vmatpush.msra.mxu0 0.0
    %396 = vmatpush.msra.mxu0 0.0
    %397 = vmatpush.msra.mxu0 0.0
    %398 = vmatpush.msra.mxu0 0.0
    %399 = vmatpush.msra.mxu0 0.0
    %400 = vmatpush.msra.mxu0 %v341
    %401 = vmatpush.msra.mxu0 %v337
    %402 = vmatpush.msra.mxu0 %v333
    %403 = vmatpush.msra.mxu0 %v329
    %404 = vmatmul.f32.gmra.mxu0 %v346
    %v405 = vpop.f32.mrf.mxu0
    %v406 = vadd.f32 0.0, %v405
    %407 = vdwg.mxu0
    %408 = vmatpush.msra.mxu0 0.0
    %409 = vmatpush.msra.mxu0 0.0
    %410 = vmatpush.msra.mxu0 0.0
    %411 = vmatpush.msra.mxu0 0.0
    %412 = vmatpush.msra.mxu0 0.0
    %413 = vmatpush.msra.mxu0 0.0
    %414 = vmatpush.msra.mxu0 0.0
    %415 = vmatpush.msra.mxu0 0.0
    %416 = vmatpush.msra.mxu0 0.0
    %417 = vmatpush.msra.mxu0 0.0
    %418 = vmatpush.msra.mxu0 0.0
    %419 = vmatpush.msra.mxu0 0.0
    %420 = vmatpush.msra.mxu0 %v342
    %421 = vmatpush.msra.mxu0 %v338
    %422 = vmatpush.msra.mxu0 %v334
    %423 = vmatpush.msra.mxu0 %v330
    %424 = vmatmul.f32.gmra.mxu0 %v346
    %v425 = vpop.f32.mrf.mxu0
    %v426 = vadd.f32 0.0, %v425
    %427 = vdwg.mxu0
    %v429 = vsel %vm151, %v310, 0
    %431 = vmatpush.msra.mxu0 0.0
    %432 = vmatpush.msra.mxu0 0.0
    %433 = vmatpush.msra.mxu0 0.0
    %434 = vmatpush.msra.mxu0 0.0
    %435 = vmatpush.msra.mxu0 0.0
    %436 = vmatpush.msra.mxu0 0.0
    %437 = vmatpush.msra.mxu0 0.0
    %438 = vmatpush.msra.mxu0 0.0
    %439 = vmatpush.msra.mxu0 0.0
    %440 = vmatpush.msra.mxu0 0.0
    %441 = vmatpush.msra.mxu0 0.0
    %442 = vmatpush.msra.mxu0 0.0
    %443 = vmatpush.msra.mxu0 %v323
    %444 = vmatpush.msra.mxu0 %v319
    %445 = vmatpush.msra.mxu0 %v315
    %446 = vmatpush.msra.mxu0 %v311
    %447 = vmatmul.f32.gmra.mxu0 %v429
    %v448 = vpop.f32.mrf.mxu0
    %v449 = vadd.f32 %v366, %v448
    %450 = vdwg.mxu0
    %451 = vmatpush.msra.mxu0 0.0
    %452 = vmatpush.msra.mxu0 0.0
    %453 = vmatpush.msra.mxu0 0.0
    %454 = vmatpush.msra.mxu0 0.0
    %455 = vmatpush.msra.mxu0 0.0
    %456 = vmatpush.msra.mxu0 0.0
    %457 = vmatpush.msra.mxu0 0.0
    %458 = vmatpush.msra.mxu0 0.0
    %459 = vmatpush.msra.mxu0 0.0
    %460 = vmatpush.msra.mxu0 0.0
    %461 = vmatpush.msra.mxu0 0.0
    %462 = vmatpush.msra.mxu0 0.0
    %463 = vmatpush.msra.mxu0 %v324
    %464 = vmatpush.msra.mxu0 %v320
    %465 = vmatpush.msra.mxu0 %v316
    %466 = vmatpush.msra.mxu0 %v312
    %467 = vmatmul.f32.gmra.mxu0 %v429
    %v468 = vpop.f32.mrf.mxu0
    %v469 = vadd.f32 %v386, %v468
    %470 = vdwg.mxu0
    %471 = vmatpush.msra.mxu0 0.0
    %472 = vmatpush.msra.mxu0 0.0
    %473 = vmatpush.msra.mxu0 0.0
    %474 = vmatpush.msra.mxu0 0.0
    %475 = vmatpush.msra.mxu0 0.0
    %476 = vmatpush.msra.mxu0 0.0
    %477 = vmatpush.msra.mxu0 0.0
    %478 = vmatpush.msra.mxu0 0.0
    %479 = vmatpush.msra.mxu0 0.0
    %480 = vmatpush.msra.mxu0 0.0
    %481 = vmatpush.msra.mxu0 0.0
    %482 = vmatpush.msra.mxu0 0.0
    %483 = vmatpush.msra.mxu0 %v325
    %484 = vmatpush.msra.mxu0 %v321
    %485 = vmatpush.msra.mxu0 %v317
    %486 = vmatpush.msra.mxu0 %v313
    %487 = vmatmul.f32.gmra.mxu0 %v429
    %v488 = vpop.f32.mrf.mxu0
    %v489 = vadd.f32 %v406, %v488
    %490 = vdwg.mxu0
    %491 = vmatpush.msra.mxu0 0.0
    %492 = vmatpush.msra.mxu0 0.0
    %493 = vmatpush.msra.mxu0 0.0
    %494 = vmatpush.msra.mxu0 0.0
    %495 = vmatpush.msra.mxu0 0.0
    %496 = vmatpush.msra.mxu0 0.0
    %497 = vmatpush.msra.mxu0 0.0
    %498 = vmatpush.msra.mxu0 0.0
    %499 = vmatpush.msra.mxu0 0.0
    %500 = vmatpush.msra.mxu0 0.0
    %501 = vmatpush.msra.mxu0 0.0
    %502 = vmatpush.msra.mxu0 0.0
    %503 = vmatpush.msra.mxu0 %v326
    %504 = vmatpush.msra.mxu0 %v322
    %505 = vmatpush.msra.mxu0 %v318
    %506 = vmatpush.msra.mxu0 %v314
    %507 = vmatmul.f32.gmra.mxu0 %v429
    %v508 = vpop.f32.mrf.mxu0
    %v509 = vadd.f32 %v426, %v508
    %510 = vdwg.mxu0
    %v511 = vld [vmem:[#allocation11] sm:$0xff]
    %v512 = vld [vmem:[#allocation11 + $0x8] sm:$0xff]
    %v513 = vld [vmem:[#allocation11 + $0x10] sm:$0xff]
    %v514 = vld [vmem:[#allocation11 + $0x18] sm:$0xff]
    %v515 = vld [vmem:[#allocation11 + $0x20] sm:$0xff]
    %v516 = vld [vmem:[#allocation11 + $0x28] sm:$0xff]
    %v517 = vld [vmem:[#allocation11 + $0x30] sm:$0xff]
    %v518 = vld [vmem:[#allocation11 + $0x38] sm:$0xff]
    %v519 = vld [vmem:[#allocation11 + $0x40] sm:$0xff]
    %v520 = vld [vmem:[#allocation11 + $0x48] sm:$0xff]
    %v521 = vld [vmem:[#allocation11 + $0x50] sm:$0xff]
    %v522 = vld [vmem:[#allocation11 + $0x58] sm:$0xff]
    %v523 = vld [vmem:[#allocation11 + $0x60] sm:$0xff]
    %v524 = vld [vmem:[#allocation11 + $0x68] sm:$0xff]
    %v525 = vld [vmem:[#allocation11 + $0x70] sm:$0xff]
    %v526 = vld [vmem:[#allocation11 + $0x78] sm:$0xff]
    %v529 = vsel %vm164, %v309, %v302
    %v530 = vsel %vm151, %v529, 0
    %532 = vmatpush.msra.mxu0 0.0
    %533 = vmatpush.msra.mxu0 0.0
    %534 = vmatpush.msra.mxu0 0.0
    %535 = vmatpush.msra.mxu0 0.0
    %536 = vmatpush.msra.mxu0 0.0
    %537 = vmatpush.msra.mxu0 0.0
    %538 = vmatpush.msra.mxu0 0.0
    %539 = vmatpush.msra.mxu0 0.0
    %540 = vmatpush.msra.mxu0 0.0
    %541 = vmatpush.msra.mxu0 0.0
    %542 = vmatpush.msra.mxu0 0.0
    %543 = vmatpush.msra.mxu0 0.0
    %544 = vmatpush.msra.mxu0 %v523
    %545 = vmatpush.msra.mxu0 %v519
    %546 = vmatpush.msra.mxu0 %v515
    %547 = vmatpush.msra.mxu0 %v511
    %548 = vmatmul.f32.gmra.mxu0 %v530
    %v549 = vpop.f32.mrf.mxu0
    %v550 = vadd.f32 0.0, %v549
    %551 = vdwg.mxu0
    %552 = vmatpush.msra.mxu0 0.0
    %553 = vmatpush.msra.mxu0 0.0
    %554 = vmatpush.msra.mxu0 0.0
    %555 = vmatpush.msra.mxu0 0.0
    %556 = vmatpush.msra.mxu0 0.0
    %557 = vmatpush.msra.mxu0 0.0
    %558 = vmatpush.msra.mxu0 0.0
    %559 = vmatpush.msra.mxu0 0.0
    %560 = vmatpush.msra.mxu0 0.0
    %561 = vmatpush.msra.mxu0 0.0
    %562 = vmatpush.msra.mxu0 0.0
    %563 = vmatpush.msra.mxu0 0.0
    %564 = vmatpush.msra.mxu0 %v524
    %565 = vmatpush.msra.mxu0 %v520
    %566 = vmatpush.msra.mxu0 %v516
    %567 = vmatpush.msra.mxu0 %v512
    %568 = vmatmul.f32.gmra.mxu0 %v530
    %v569 = vpop.f32.mrf.mxu0
    %v570 = vadd.f32 0.0, %v569
    %571 = vdwg.mxu0
    %572 = vmatpush.msra.mxu0 0.0
    %573 = vmatpush.msra.mxu0 0.0
    %574 = vmatpush.msra.mxu0 0.0
    %575 = vmatpush.msra.mxu0 0.0
    %576 = vmatpush.msra.mxu0 0.0
    %577 = vmatpush.msra.mxu0 0.0
    %578 = vmatpush.msra.mxu0 0.0
    %579 = vmatpush.msra.mxu0 0.0
    %580 = vmatpush.msra.mxu0 0.0
    %581 = vmatpush.msra.mxu0 0.0
    %582 = vmatpush.msra.mxu0 0.0
    %583 = vmatpush.msra.mxu0 0.0
    %584 = vmatpush.msra.mxu0 %v525
    %585 = vmatpush.msra.mxu0 %v521
    %586 = vmatpush.msra.mxu0 %v517
    %587 = vmatpush.msra.mxu0 %v513
    %588 = vmatmul.f32.gmra.mxu0 %v530
    %v589 = vpop.f32.mrf.mxu0
    %v590 = vadd.f32 0.0, %v589
    %591 = vdwg.mxu0
    %592 = vmatpush.msra.mxu0 0.0
    %593 = vmatpush.msra.mxu0 0.0
    %594 = vmatpush.msra.mxu0 0.0
    %595 = vmatpush.msra.mxu0 0.0
    %596 = vmatpush.msra.mxu0 0.0
    %597 = vmatpush.msra.mxu0 0.0
    %598 = vmatpush.msra.mxu0 0.0
    %599 = vmatpush.msra.mxu0 0.0
    %600 = vmatpush.msra.mxu0 0.0
    %601 = vmatpush.msra.mxu0 0.0
    %602 = vmatpush.msra.mxu0 0.0
    %603 = vmatpush.msra.mxu0 0.0
    %604 = vmatpush.msra.mxu0 %v526
    %605 = vmatpush.msra.mxu0 %v522
    %606 = vmatpush.msra.mxu0 %v518
    %607 = vmatpush.msra.mxu0 %v514
    %608 = vmatmul.f32.gmra.mxu0 %v530
    %v609 = vpop.f32.mrf.mxu0
    %v610 = vadd.f32 0.0, %v609
    %611 = vdwg.mxu0
    %v612 = vadd.f32 %v449, %v550
    %v613 = vadd.f32 %v469, %v570
    %v614 = vadd.f32 %v489, %v590
    %v615 = vadd.f32 %v509, %v610
    %v616 = vld [vmem:[%s7] sm:$0xf]
    %v618 = vperm.slane %v616, 0
    %v619 = vperm.slane %v616, 1
    %v620 = vperm.slane %v616, 2
    %v621 = vperm.slane %v616, 3
    %v626 = vadd.f32 %v612, %v618
    %v627 = vadd.f32 %v613, %v619
    %v628 = vadd.f32 %v614, %v620
    %v629 = vadd.f32 %v615, %v621
    %v630 = vmax.f32 %v626, 0.0
    %v631 = vmax.f32 %v627, 0.0
    %v632 = vmax.f32 %v628, 0.0
    %v633 = vmax.f32 %v629, 0.0
    %v634 = vld [vmem:[#allocation13] sm:$0xff]
    %v635 = vld [vmem:[#allocation13 + $0x8] sm:$0xff]
    %v636 = vld [vmem:[#allocation13 + $0x10] sm:$0xff]
    %v637 = vld [vmem:[#allocation13 + $0x18] sm:$0xff]
    %v638 = vld [vmem:[#allocation13 + $0x20] sm:$0xff]
    %v639 = vld [vmem:[#allocation13 + $0x28] sm:$0xff]
    %v640 = vld [vmem:[#allocation13 + $0x30] sm:$0xff]
    %v641 = vld [vmem:[#allocation13 + $0x38] sm:$0xff]
    %v642 = vld [vmem:[#allocation13 + $0x40] sm:$0xff]
    %v643 = vld [vmem:[#allocation13 + $0x48] sm:$0xff]
    %v644 = vld [vmem:[#allocation13 + $0x50] sm:$0xff]
    %v645 = vld [vmem:[#allocation13 + $0x58] sm:$0xff]
    %v646 = vld [vmem:[#allocation13 + $0x60] sm:$0xff]
    %v647 = vld [vmem:[#allocation13 + $0x68] sm:$0xff]
    %v648 = vld [vmem:[#allocation13 + $0x70] sm:$0xff]
    %v649 = vld [vmem:[#allocation13 + $0x78] sm:$0xff]
    %v650 = vld [vmem:[#allocation13 + $0x80] sm:$0xff]
    %v651 = vld [vmem:[#allocation13 + $0x88] sm:$0xff]
    %v652 = vld [vmem:[#allocation13 + $0x90] sm:$0xff]
    %v653 = vld [vmem:[#allocation13 + $0x98] sm:$0xff]
    %v654 = vld [vmem:[#allocation13 + $0xa0] sm:$0xff]
    %v655 = vld [vmem:[#allocation13 + $0xa8] sm:$0xff]
    %v656 = vld [vmem:[#allocation13 + $0xb0] sm:$0xff]
    %v657 = vld [vmem:[#allocation13 + $0xb8] sm:$0xff]
    %v658 = vld [vmem:[#allocation13 + $0xc0] sm:$0xff]
    %v659 = vld [vmem:[#allocation13 + $0xc8] sm:$0xff]
    %v660 = vld [vmem:[#allocation13 + $0xd0] sm:$0xff]
    %v661 = vld [vmem:[#allocation13 + $0xd8] sm:$0xff]
    %v662 = vld [vmem:[#allocation13 + $0xe0] sm:$0xff]
    %v663 = vld [vmem:[#allocation13 + $0xe8] sm:$0xff]
    %v664 = vld [vmem:[#allocation13 + $0xf0] sm:$0xff]
    %v665 = vld [vmem:[#allocation13 + $0xf8] sm:$0xff]
    %v666 = vld [vmem:[#allocation13 + $0x100] sm:$0xff]
    %v667 = vld [vmem:[#allocation13 + $0x108] sm:$0xff]
    %v668 = vld [vmem:[#allocation13 + $0x110] sm:$0xff]
    %v669 = vld [vmem:[#allocation13 + $0x118] sm:$0xff]
    %v670 = vld [vmem:[#allocation13 + $0x120] sm:$0xff]
    %v671 = vld [vmem:[#allocation13 + $0x128] sm:$0xff]
    %v672 = vld [vmem:[#allocation13 + $0x130] sm:$0xff]
    %v673 = vld [vmem:[#allocation13 + $0x138] sm:$0xff]
    %v674 = vld [vmem:[#allocation13 + $0x140] sm:$0xff]
    %v675 = vld [vmem:[#allocation13 + $0x148] sm:$0xff]
    %v676 = vld [vmem:[#allocation13 + $0x150] sm:$0xff]
    %v677 = vld [vmem:[#allocation13 + $0x158] sm:$0xff]
    %v678 = vld [vmem:[#allocation13 + $0x160] sm:$0xff]
    %v679 = vld [vmem:[#allocation13 + $0x168] sm:$0xff]
    %v680 = vld [vmem:[#allocation13 + $0x170] sm:$0xff]
    %v681 = vld [vmem:[#allocation13 + $0x178] sm:$0xff]
    %v682 = vld [vmem:[#allocation13 + $0x180] sm:$0xff]
    %v683 = vld [vmem:[#allocation13 + $0x188] sm:$0xff]
    %v684 = vld [vmem:[#allocation13 + $0x190] sm:$0xff]
    %v685 = vld [vmem:[#allocation13 + $0x198] sm:$0xff]
    %v686 = vld [vmem:[#allocation13 + $0x1a0] sm:$0xff]
    %v687 = vld [vmem:[#allocation13 + $0x1a8] sm:$0xff]
    %v688 = vld [vmem:[#allocation13 + $0x1b0] sm:$0xff]
    %v689 = vld [vmem:[#allocation13 + $0x1b8] sm:$0xff]
    %v690 = vld [vmem:[#allocation13 + $0x1c0] sm:$0xff]
    %v691 = vld [vmem:[#allocation13 + $0x1c8] sm:$0xff]
    %v692 = vld [vmem:[#allocation13 + $0x1d0] sm:$0xff]
    %v693 = vld [vmem:[#allocation13 + $0x1d8] sm:$0xff]
    %v694 = vld [vmem:[#allocation13 + $0x1e0] sm:$0xff]
    %v695 = vld [vmem:[#allocation13 + $0x1e8] sm:$0xff]
    %v696 = vld [vmem:[#allocation13 + $0x1f0] sm:$0xff]
    %v697 = vld [vmem:[#allocation13 + $0x1f8] sm:$0xff]
    %v698 = vld [vmem:[%s9] sm:$0x1]
    %v700 = vperm.slane %v698, 0
    %702 = vmatpush.msra.mxu0 %v649
    %703 = vmatpush.msra.mxu0 %v648
    %704 = vmatpush.msra.mxu0 %v647
    %705 = vmatpush.msra.mxu0 %v646
    %706 = vmatpush.msra.mxu0 %v645
    %707 = vmatpush.msra.mxu0 %v644
    %708 = vmatpush.msra.mxu0 %v643
    %709 = vmatpush.msra.mxu0 %v642
    %710 = vmatpush.msra.mxu0 %v641
    %711 = vmatpush.msra.mxu0 %v640
    %712 = vmatpush.msra.mxu0 %v639
    %713 = vmatpush.msra.mxu0 %v638
    %714 = vmatpush.msra.mxu0 %v637
    %715 = vmatpush.msra.mxu0 %v636
    %716 = vmatpush.msra.mxu0 %v635
    %717 = vmatpush.msra.mxu0 %v634
    %718 = vmatmul.f32.gmra.mxu0 %v630
    %v719 = vpop.f32.mrf.mxu0
    %v720 = vadd.f32 %v700, %v719
    %721 = vdwg.mxu0
    %722 = vmatpush.msra.mxu0 %v665
    %723 = vmatpush.msra.mxu0 %v664
    %724 = vmatpush.msra.mxu0 %v663
    %725 = vmatpush.msra.mxu0 %v662
    %726 = vmatpush.msra.mxu0 %v661
    %727 = vmatpush.msra.mxu0 %v660
    %728 = vmatpush.msra.mxu0 %v659
    %729 = vmatpush.msra.mxu0 %v658
    %730 = vmatpush.msra.mxu0 %v657
    %731 = vmatpush.msra.mxu0 %v656
    %732 = vmatpush.msra.mxu0 %v655
    %733 = vmatpush.msra.mxu0 %v654
    %734 = vmatpush.msra.mxu0 %v653
    %735 = vmatpush.msra.mxu0 %v652
    %736 = vmatpush.msra.mxu0 %v651
    %737 = vmatpush.msra.mxu0 %v650
    %738 = vmatmul.f32.gmra.mxu0 %v631
    %v739 = vpop.f32.mrf.mxu0
    %v740 = vadd.f32 %v720, %v739
    %741 = vdwg.mxu0
    %742 = vmatpush.msra.mxu0 %v681
    %743 = vmatpush.msra.mxu0 %v680
    %744 = vmatpush.msra.mxu0 %v679
    %745 = vmatpush.msra.mxu0 %v678
    %746 = vmatpush.msra.mxu0 %v677
    %747 = vmatpush.msra.mxu0 %v676
    %748 = vmatpush.msra.mxu0 %v675
    %749 = vmatpush.msra.mxu0 %v674
    %750 = vmatpush.msra.mxu0 %v673
    %751 = vmatpush.msra.mxu0 %v672
    %752 = vmatpush.msra.mxu0 %v671
    %753 = vmatpush.msra.mxu0 %v670
    %754 = vmatpush.msra.mxu0 %v669
    %755 = vmatpush.msra.mxu0 %v668
    %756 = vmatpush.msra.mxu0 %v667
    %757 = vmatpush.msra.mxu0 %v666
    %758 = vmatmul.f32.gmra.mxu0 %v632
    %v759 = vpop.f32.mrf.mxu0
    %v760 = vadd.f32 %v740, %v759
    %761 = vdwg.mxu0
    %762 = vmatpush.msra.mxu0 %v697
    %763 = vmatpush.msra.mxu0 %v696
    %764 = vmatpush.msra.mxu0 %v695
    %765 = vmatpush.msra.mxu0 %v694
    %766 = vmatpush.msra.mxu0 %v693
    %767 = vmatpush.msra.mxu0 %v692
    %768 = vmatpush.msra.mxu0 %v691
    %769 = vmatpush.msra.mxu0 %v690
    %770 = vmatpush.msra.mxu0 %v689
    %771 = vmatpush.msra.mxu0 %v688
    %772 = vmatpush.msra.mxu0 %v687
    %773 = vmatpush.msra.mxu0 %v686
    %774 = vmatpush.msra.mxu0 %v685
    %775 = vmatpush.msra.mxu0 %v684
    %776 = vmatpush.msra.mxu0 %v683
    %777 = vmatpush.msra.mxu0 %v682
    %778 = vmatmul.f32.gmra.mxu0 %v633
    %v779 = vpop.f32.mrf.mxu0
    %v780 = vadd.f32 %v760, %v779
    %781 = vdwg.mxu0
    %782 = vst [vmem:[#allocation14] sm:$0x3] %v780
    // Predicated region
    $region70: #{tpu_custom_call.1} parent=1 // pred_check
      _
    $region71: #{tpu_custom_call.1} parent=1 // pred_check_branch
      %784 = sbr.rel (0) target = $region73
    $region72: #{tpu_custom_call.1} parent=1 // pred_region
      %786 = vsyncadd [#allocation4], 0
      %s788 = sshll.u32 [#allocation14], 4
      %s789 = int_to_ptr.vmem [resolvable:$true] %s788
      %s790 = sshll.u32 %s10, 4
      %s791 = int_to_ptr.hbm [resolvable:$true] %s790
      %793 = dma.vmem_to_hbm [thread:$0]  %s789, 32, %s791, [#allocation4]
    $region73: #{tpu_custom_call.1} parent=1 // pred_fallthru
      _
    // Predicated region
    $region74: #{tpu_custom_call.1} parent=1 // pred_check
      _
    $region75: #{tpu_custom_call.1} parent=1 // pred_check_branch
      %795 = sbr.rel (0) target = $region77
    $region76: #{tpu_custom_call.1} parent=1 // pred_region
      %797 = dma.done [#allocation4], 32
    $region77: #{tpu_custom_call.1} parent=1 // pred_fallthru
      _
    %798 = vsyncpa [#allocation3], 1
    %799 = vsyncpa [#allocation6], 1
    %800 = vsyncpa [#allocation9], 1
    %801 = vsyncpa [#allocation12], 1
    %802 = vsyncpa [#allocation4], 1

</llo_original>
